<compile_context>
chip_gen: v6e
topology: v6e:2x2x1
jax: 0.10.0
libtpu: 0.0.40
codegen_flags: <defaults>
</compile_context>

<pallas_src>
import jax
import jax.numpy as jnp
from jax.experimental import pallas as pl
from jax.experimental.pallas import tpu as pltpu


def _encoder_kernel(obs_ref, win_ref, bin_ref, whh_ref, out_ref):
    """Single-program kernel (no grid): everything fits in VMEM/vregs.

    obs_ref : (seq, batch, 2)   f32
    win_ref : (2, 4H)           f32   fused input projection (g-cols pre-scaled x2)
    bin_ref : (1, 4H)           f32   fused bias             (g-cols pre-scaled x2)
    whh_ref : (H, 4H)           f32   recurrent weights      (g-cols pre-scaled x2)
    out_ref : (1, batch, H)     f32
    """
    seq, batch, _ = obs_ref.shape
    H = whh_ref.shape[0]

    # --- fused input projection for ALL timesteps on the VPU (two broadcast FMAs) ---
    obs = obs_ref[...]                       # (seq, batch, 2)
    wi0 = win_ref[0:1, :]                    # (1, 4H)
    wi1 = win_ref[1:2, :]                    # (1, 4H)
    b_in = bin_ref[...]                      # (1, 4H)
    gx = obs[:, :, 0:1] * wi0 + obs[:, :, 1:2] * wi1 + b_in   # (seq, batch, 4H)

    w_hh = whh_ref[...]                      # (H, 4H) resident across all steps

    # --- init hidden / cell state to zeros (matches init_hidden), kept in vregs ---
    h = jnp.zeros((batch, H), jnp.float32)
    c = jnp.zeros((batch, H), jnp.float32)

    # --- statically-unrolled recurrence over timesteps ---
    for t in range(seq):                     # seq is static -> full unroll
        g = gx[t] + jnp.dot(h, w_hh, preferred_element_type=jnp.float32)  # (batch, 4H)
        s = jax.nn.sigmoid(g)                # single full-128-lane EUP pass
        i = s[:, 0 * H:1 * H]
        f = s[:, 1 * H:2 * H]
        gg = 2.0 * s[:, 2 * H:3 * H] - 1.0   # tanh(x) = 2*sigmoid(2x) - 1 (g-cols pre-scaled)
        o = s[:, 3 * H:4 * H]
        c = f * c + i * gg
        h = o * jnp.tanh(c)

    out_ref[0] = h.astype(out_ref.dtype)


def encoder_forward(obs_traj, fused_params):
    """obs_traj: (obs_len, batch, 2) f32 -> final_h: (1, batch, hidden_dim) f32."""
    seq, batch, _ = obs_traj.shape
    w_in, b_in, w_hh = fused_params
    H = w_hh.shape[0]

    vmem = pl.BlockSpec(memory_space=pltpu.MemorySpace.VMEM)
    # NOTE: at production sizes (batch >= 128, H a multiple of 128) add a grid over
    # batch blocks with dimension_semantics=("parallel",) and bf16 weights; at the
    # tiny sizes here the kernel is pure fixed latency, so a single program is best.
    return pl.pallas_call(
        _encoder_kernel,
        out_shape=jax.ShapeDtypeStruct((1, batch, H), jnp.float32),
        in_specs=[vmem] * 4,
        out_specs=vmem,
    )(obs_traj, w_in, b_in, w_hh)


def init_params(key, embedding_dim, hidden_dim):
    """Deterministic synthetic parameters in torch-native shapes."""
    E, H = embedding_dim, hidden_dim
    ks = jax.random.split(key, 6)
    w_sp_t = jax.random.normal(ks[0], (E, 2), jnp.float32) * 0.5          # spatial_embedding.weight
    b_sp_t = jax.random.normal(ks[1], (E,), jnp.float32) * 0.1            # spatial_embedding.bias
    w_ih_t = jax.random.normal(ks[2], (4 * H, E), jnp.float32) * (1.0 / jnp.sqrt(E))
    b_ih_t = jax.random.normal(ks[3], (4 * H,), jnp.float32) * 0.1
    w_hh_t = jax.random.normal(ks[4], (4 * H, H), jnp.float32) * (1.0 / jnp.sqrt(H))
    b_hh_t = jax.random.normal(ks[5], (4 * H,), jnp.float32) * 0.1
    return w_sp_t, b_sp_t, w_ih_t, b_ih_t, w_hh_t, b_hh_t


def fuse_params(raw_params, hidden_dim):
    """Fold Linear(2->E) into the LSTM input projection and pre-scale g-gate cols by 2."""
    w_sp_t, b_sp_t, w_ih_t, b_ih_t, w_hh_t, b_hh_t = raw_params
    H = hidden_dim
    w_sp = w_sp_t.T                                   # (2, E)
    w_ih = w_ih_t.T                                   # (E, 4H)
    w_hh = w_hh_t.T                                   # (H, 4H)
    w_in = w_sp @ w_ih                                # (2, 4H)
    b_in = b_sp_t @ w_ih + b_ih_t + b_hh_t            # (4H,)
    # pre-scale the g-gate columns so one full-width sigmoid yields tanh via 2*sig(2x)-1
    scale = jnp.concatenate(
        [jnp.ones((2 * H,), jnp.float32),
         jnp.full((H,), 2.0, jnp.float32),
         jnp.ones((H,), jnp.float32)])
    return (
        (w_in * scale).astype(jnp.float32),                    # (2, 4H)
        (b_in * scale).reshape(1, 4 * H).astype(jnp.float32),  # (1, 4H)
        (w_hh * scale).astype(jnp.float32),                    # (H, 4H)
    )


def encoder_reference(obs_traj, raw_params, *, hidden_dim):
    """Pure-JAX reference of the PyTorch forward (standard, un-fused formulation)."""
    w_sp_t, b_sp_t, w_ih_t, b_ih_t, w_hh_t, b_hh_t = raw_params
    seq, batch, _ = obs_traj.shape
    H = hidden_dim
    emb = obs_traj.reshape(-1, 2) @ w_sp_t.T + b_sp_t
    emb = emb.reshape(seq, batch, -1)
    h = jnp.zeros((batch, H), jnp.float32)
    c = jnp.zeros((batch, H), jnp.float32)
    for t in range(seq):
        g = emb[t] @ w_ih_t.T + b_ih_t + h @ w_hh_t.T + b_hh_t
        i = jax.nn.sigmoid(g[:, 0 * H:1 * H])
        f = jax.nn.sigmoid(g[:, 1 * H:2 * H])
        gg = jnp.tanh(g[:, 2 * H:3 * H])
        o = jax.nn.sigmoid(g[:, 3 * H:4 * H])
        c = f * c + i * gg
        h = o * jnp.tanh(c)
    return h[None]  # (1, batch, H)


if __name__ == "__main__":
    EMBEDDING_DIM = 32
    HIDDEN_DIM = 32
    NUM_LAYERS = 1          # matches module default; dropout=0.0 -> no-op in eval
    OBS_LEN = 8
    BATCH = 4

    key = jax.random.PRNGKey(0)
    k_obs, k_par = jax.random.split(key)
    obs_traj = jax.random.normal(k_obs, (OBS_LEN, BATCH, 2), jnp.float32)

    raw_params = init_params(k_par, EMBEDDING_DIM, HIDDEN_DIM)
    fused_params = fuse_params(raw_params, HIDDEN_DIM)

    final_h = encoder_forward(obs_traj, fused_params)
    final_h = jax.block_until_ready(final_h)

    ref = encoder_reference(obs_traj, raw_params, hidden_dim=HIDDEN_DIM)
    assert final_h.shape == (NUM_LAYERS, BATCH, HIDDEN_DIM)
    assert jnp.allclose(final_h, ref, atol=1e-4, rtol=1e-4)

    print("KERNEL_OK")
</pallas_src>

<mosaic_0001>
module attributes {stable_mosaic.version = 11 : i64} {
  func.func @_encoder_kernel(%arg0: memref<8x4x2xf32, #tpu.memory_space<vmem>>, %arg1: memref<2x128xf32, #tpu.memory_space<vmem>>, %arg2: memref<1x128xf32, #tpu.memory_space<vmem>>, %arg3: memref<32x128xf32, #tpu.memory_space<vmem>>, %arg4: memref<1x4x32xf32, #tpu.memory_space<vmem>>) attributes {dimension_semantics = [], scalar_prefetch = 0 : i64, scratch_operands = 0 : i64, tpu.core_type = #tpu.core_type<tc>} {
    %c0 = arith.constant 0 : index
    %c0_0 = arith.constant 0 : index
    %c0_1 = arith.constant 0 : index
    %0 = vector.load %arg0[%c0, %c0_0, %c0_1] : memref<8x4x2xf32, #tpu.memory_space<vmem>>, vector<8x4x2xf32>
    %c0_2 = arith.constant 0 : index
    %c0_3 = arith.constant 0 : index
    %1 = vector.load %arg1[%c0_2, %c0_3] : memref<2x128xf32, #tpu.memory_space<vmem>>, vector<1x128xf32>
    %c1 = arith.constant 1 : index
    %c0_4 = arith.constant 0 : index
    %2 = vector.load %arg1[%c1, %c0_4] : memref<2x128xf32, #tpu.memory_space<vmem>>, vector<1x128xf32>
    %c0_5 = arith.constant 0 : index
    %c0_6 = arith.constant 0 : index
    %3 = vector.load %arg2[%c0_5, %c0_6] : memref<1x128xf32, #tpu.memory_space<vmem>>, vector<1x128xf32>
    %4 = vector.extract_strided_slice %0 {offsets = [0, 0, 0], sizes = [8, 4, 1], strides = [1, 1, 1]} : vector<8x4x2xf32> to vector<8x4x1xf32>
    %5 = vector.shape_cast %1 : vector<1x128xf32> to vector<1x1x128xf32>
    %6 = vector.broadcast %4 : vector<8x4x1xf32> to vector<8x4x128xf32>
    %7 = vector.broadcast %5 : vector<1x1x128xf32> to vector<8x4x128xf32>
    %8 = arith.mulf %6, %7 : vector<8x4x128xf32>
    %9 = vector.extract_strided_slice %0 {offsets = [0, 0, 1], sizes = [8, 4, 1], strides = [1, 1, 1]} : vector<8x4x2xf32> to vector<8x4x1xf32>
    %10 = vector.shape_cast %2 : vector<1x128xf32> to vector<1x1x128xf32>
    %11 = vector.broadcast %9 : vector<8x4x1xf32> to vector<8x4x128xf32>
    %12 = vector.broadcast %10 : vector<1x1x128xf32> to vector<8x4x128xf32>
    %13 = arith.mulf %11, %12 : vector<8x4x128xf32>
    %14 = arith.addf %8, %13 : vector<8x4x128xf32>
    %15 = vector.shape_cast %3 : vector<1x128xf32> to vector<1x1x128xf32>
    %16 = vector.broadcast %15 : vector<1x1x128xf32> to vector<8x4x128xf32>
    %17 = arith.addf %14, %16 : vector<8x4x128xf32>
    %c0_7 = arith.constant 0 : index
    %c0_8 = arith.constant 0 : index
    %18 = vector.load %arg3[%c0_7, %c0_8] : memref<32x128xf32, #tpu.memory_space<vmem>>, vector<32x128xf32>
    %cst = arith.constant 0.000000e+00 : f32
    %19 = vector.broadcast %cst : f32 to vector<4x32xf32>
    %cst_9 = arith.constant 0.000000e+00 : f32
    %20 = vector.broadcast %cst_9 : f32 to vector<4x32xf32>
    %21 = vector.extract_strided_slice %17 {offsets = [0, 0, 0], sizes = [1, 4, 128], strides = [1, 1, 1]} : vector<8x4x128xf32> to vector<1x4x128xf32>
    %22 = vector.shape_cast %21 : vector<1x4x128xf32> to vector<4x128xf32>
    %cst_10 = arith.constant dense<0.000000e+00> : vector<4x128xf32>
    %23 = tpu.matmul %19, %18, %cst_10 {dimension_numbers = #tpu.dot_dimension_numbers<[1], [0], [0], [1], [0, 0, 1, 1], [], []>} : vector<4x32xf32>, vector<32x128xf32>, vector<4x128xf32> -> vector<4x128xf32>
    %24 = arith.addf %22, %23 : vector<4x128xf32>
    %25 = arith.negf %24 : vector<4x128xf32>
    %26 = math.exp %25 : vector<4x128xf32>
    %cst_11 = arith.constant 1.000000e+00 : f32
    %27 = vector.broadcast %cst_11 : f32 to vector<4x128xf32>
    %28 = arith.addf %27, %26 : vector<4x128xf32>
    %29 = arith.divf %27, %28 : vector<4x128xf32>
    %30 = vector.extract_strided_slice %29 {offsets = [0, 0], sizes = [4, 32], strides = [1, 1]} : vector<4x128xf32> to vector<4x32xf32>
    %31 = vector.extract_strided_slice %29 {offsets = [0, 32], sizes = [4, 32], strides = [1, 1]} : vector<4x128xf32> to vector<4x32xf32>
    %32 = vector.extract_strided_slice %29 {offsets = [0, 64], sizes = [4, 32], strides = [1, 1]} : vector<4x128xf32> to vector<4x32xf32>
    %cst_12 = arith.constant 2.000000e+00 : f32
    %33 = vector.broadcast %cst_12 : f32 to vector<4x32xf32>
    %34 = arith.mulf %33, %32 : vector<4x32xf32>
    %cst_13 = arith.constant 1.000000e+00 : f32
    %35 = vector.broadcast %cst_13 : f32 to vector<4x32xf32>
    %36 = arith.subf %34, %35 : vector<4x32xf32>
    %37 = vector.extract_strided_slice %29 {offsets = [0, 96], sizes = [4, 32], strides = [1, 1]} : vector<4x128xf32> to vector<4x32xf32>
    %38 = arith.mulf %31, %20 : vector<4x32xf32>
    %39 = arith.mulf %30, %36 : vector<4x32xf32>
    %40 = arith.addf %38, %39 : vector<4x32xf32>
    %41 = math.tanh %40 : vector<4x32xf32>
    %42 = arith.mulf %37, %41 : vector<4x32xf32>
    %43 = vector.extract_strided_slice %17 {offsets = [1, 0, 0], sizes = [1, 4, 128], strides = [1, 1, 1]} : vector<8x4x128xf32> to vector<1x4x128xf32>
    %44 = vector.shape_cast %43 : vector<1x4x128xf32> to vector<4x128xf32>
    %cst_14 = arith.constant dense<0.000000e+00> : vector<4x128xf32>
    %45 = tpu.matmul %42, %18, %cst_14 {dimension_numbers = #tpu.dot_dimension_numbers<[1], [0], [0], [1], [0, 0, 1, 1], [], []>} : vector<4x32xf32>, vector<32x128xf32>, vector<4x128xf32> -> vector<4x128xf32>
    %46 = arith.addf %44, %45 : vector<4x128xf32>
    %47 = arith.negf %46 : vector<4x128xf32>
    %48 = math.exp %47 : vector<4x128xf32>
    %cst_15 = arith.constant 1.000000e+00 : f32
    %49 = vector.broadcast %cst_15 : f32 to vector<4x128xf32>
    %50 = arith.addf %49, %48 : vector<4x128xf32>
    %51 = arith.divf %49, %50 : vector<4x128xf32>
    %52 = vector.extract_strided_slice %51 {offsets = [0, 0], sizes = [4, 32], strides = [1, 1]} : vector<4x128xf32> to vector<4x32xf32>
    %53 = vector.extract_strided_slice %51 {offsets = [0, 32], sizes = [4, 32], strides = [1, 1]} : vector<4x128xf32> to vector<4x32xf32>
    %54 = vector.extract_strided_slice %51 {offsets = [0, 64], sizes = [4, 32], strides = [1, 1]} : vector<4x128xf32> to vector<4x32xf32>
    %cst_16 = arith.constant 2.000000e+00 : f32
    %55 = vector.broadcast %cst_16 : f32 to vector<4x32xf32>
    %56 = arith.mulf %55, %54 : vector<4x32xf32>
    %cst_17 = arith.constant 1.000000e+00 : f32
    %57 = vector.broadcast %cst_17 : f32 to vector<4x32xf32>
    %58 = arith.subf %56, %57 : vector<4x32xf32>
    %59 = vector.extract_strided_slice %51 {offsets = [0, 96], sizes = [4, 32], strides = [1, 1]} : vector<4x128xf32> to vector<4x32xf32>
    %60 = arith.mulf %53, %40 : vector<4x32xf32>
    %61 = arith.mulf %52, %58 : vector<4x32xf32>
    %62 = arith.addf %60, %61 : vector<4x32xf32>
    %63 = math.tanh %62 : vector<4x32xf32>
    %64 = arith.mulf %59, %63 : vector<4x32xf32>
    %65 = vector.extract_strided_slice %17 {offsets = [2, 0, 0], sizes = [1, 4, 128], strides = [1, 1, 1]} : vector<8x4x128xf32> to vector<1x4x128xf32>
    %66 = vector.shape_cast %65 : vector<1x4x128xf32> to vector<4x128xf32>
    %cst_18 = arith.constant dense<0.000000e+00> : vector<4x128xf32>
    %67 = tpu.matmul %64, %18, %cst_18 {dimension_numbers = #tpu.dot_dimension_numbers<[1], [0], [0], [1], [0, 0, 1, 1], [], []>} : vector<4x32xf32>, vector<32x128xf32>, vector<4x128xf32> -> vector<4x128xf32>
    %68 = arith.addf %66, %67 : vector<4x128xf32>
    %69 = arith.negf %68 : vector<4x128xf32>
    %70 = math.exp %69 : vector<4x128xf32>
    %cst_19 = arith.constant 1.000000e+00 : f32
    %71 = vector.broadcast %cst_19 : f32 to vector<4x128xf32>
    %72 = arith.addf %71, %70 : vector<4x128xf32>
    %73 = arith.divf %71, %72 : vector<4x128xf32>
    %74 = vector.extract_strided_slice %73 {offsets = [0, 0], sizes = [4, 32], strides = [1, 1]} : vector<4x128xf32> to vector<4x32xf32>
    %75 = vector.extract_strided_slice %73 {offsets = [0, 32], sizes = [4, 32], strides = [1, 1]} : vector<4x128xf32> to vector<4x32xf32>
    %76 = vector.extract_strided_slice %73 {offsets = [0, 64], sizes = [4, 32], strides = [1, 1]} : vector<4x128xf32> to vector<4x32xf32>
    %cst_20 = arith.constant 2.000000e+00 : f32
    %77 = vector.broadcast %cst_20 : f32 to vector<4x32xf32>
    %78 = arith.mulf %77, %76 : vector<4x32xf32>
    %cst_21 = arith.constant 1.000000e+00 : f32
    %79 = vector.broadcast %cst_21 : f32 to vector<4x32xf32>
    %80 = arith.subf %78, %79 : vector<4x32xf32>
    %81 = vector.extract_strided_slice %73 {offsets = [0, 96], sizes = [4, 32], strides = [1, 1]} : vector<4x128xf32> to vector<4x32xf32>
    %82 = arith.mulf %75, %62 : vector<4x32xf32>
    %83 = arith.mulf %74, %80 : vector<4x32xf32>
    %84 = arith.addf %82, %83 : vector<4x32xf32>
    %85 = math.tanh %84 : vector<4x32xf32>
    %86 = arith.mulf %81, %85 : vector<4x32xf32>
    %87 = vector.extract_strided_slice %17 {offsets = [3, 0, 0], sizes = [1, 4, 128], strides = [1, 1, 1]} : vector<8x4x128xf32> to vector<1x4x128xf32>
    %88 = vector.shape_cast %87 : vector<1x4x128xf32> to vector<4x128xf32>
    %cst_22 = arith.constant dense<0.000000e+00> : vector<4x128xf32>
    %89 = tpu.matmul %86, %18, %cst_22 {dimension_numbers = #tpu.dot_dimension_numbers<[1], [0], [0], [1], [0, 0, 1, 1], [], []>} : vector<4x32xf32>, vector<32x128xf32>, vector<4x128xf32> -> vector<4x128xf32>
    %90 = arith.addf %88, %89 : vector<4x128xf32>
    %91 = arith.negf %90 : vector<4x128xf32>
    %92 = math.exp %91 : vector<4x128xf32>
    %cst_23 = arith.constant 1.000000e+00 : f32
    %93 = vector.broadcast %cst_23 : f32 to vector<4x128xf32>
    %94 = arith.addf %93, %92 : vector<4x128xf32>
    %95 = arith.divf %93, %94 : vector<4x128xf32>
    %96 = vector.extract_strided_slice %95 {offsets = [0, 0], sizes = [4, 32], strides = [1, 1]} : vector<4x128xf32> to vector<4x32xf32>
    %97 = vector.extract_strided_slice %95 {offsets = [0, 32], sizes = [4, 32], strides = [1, 1]} : vector<4x128xf32> to vector<4x32xf32>
    %98 = vector.extract_strided_slice %95 {offsets = [0, 64], sizes = [4, 32], strides = [1, 1]} : vector<4x128xf32> to vector<4x32xf32>
    %cst_24 = arith.constant 2.000000e+00 : f32
    %99 = vector.broadcast %cst_24 : f32 to vector<4x32xf32>
    %100 = arith.mulf %99, %98 : vector<4x32xf32>
    %cst_25 = arith.constant 1.000000e+00 : f32
    %101 = vector.broadcast %cst_25 : f32 to vector<4x32xf32>
    %102 = arith.subf %100, %101 : vector<4x32xf32>
    %103 = vector.extract_strided_slice %95 {offsets = [0, 96], sizes = [4, 32], strides = [1, 1]} : vector<4x128xf32> to vector<4x32xf32>
    %104 = arith.mulf %97, %84 : vector<4x32xf32>
    %105 = arith.mulf %96, %102 : vector<4x32xf32>
    %106 = arith.addf %104, %105 : vector<4x32xf32>
    %107 = math.tanh %106 : vector<4x32xf32>
    %108 = arith.mulf %103, %107 : vector<4x32xf32>
    %109 = vector.extract_strided_slice %17 {offsets = [4, 0, 0], sizes = [1, 4, 128], strides = [1, 1, 1]} : vector<8x4x128xf32> to vector<1x4x128xf32>
    %110 = vector.shape_cast %109 : vector<1x4x128xf32> to vector<4x128xf32>
    %cst_26 = arith.constant dense<0.000000e+00> : vector<4x128xf32>
    %111 = tpu.matmul %108, %18, %cst_26 {dimension_numbers = #tpu.dot_dimension_numbers<[1], [0], [0], [1], [0, 0, 1, 1], [], []>} : vector<4x32xf32>, vector<32x128xf32>, vector<4x128xf32> -> vector<4x128xf32>
    %112 = arith.addf %110, %111 : vector<4x128xf32>
    %113 = arith.negf %112 : vector<4x128xf32>
    %114 = math.exp %113 : vector<4x128xf32>
    %cst_27 = arith.constant 1.000000e+00 : f32
    %115 = vector.broadcast %cst_27 : f32 to vector<4x128xf32>
    %116 = arith.addf %115, %114 : vector<4x128xf32>
    %117 = arith.divf %115, %116 : vector<4x128xf32>
    %118 = vector.extract_strided_slice %117 {offsets = [0, 0], sizes = [4, 32], strides = [1, 1]} : vector<4x128xf32> to vector<4x32xf32>
    %119 = vector.extract_strided_slice %117 {offsets = [0, 32], sizes = [4, 32], strides = [1, 1]} : vector<4x128xf32> to vector<4x32xf32>
    %120 = vector.extract_strided_slice %117 {offsets = [0, 64], sizes = [4, 32], strides = [1, 1]} : vector<4x128xf32> to vector<4x32xf32>
    %cst_28 = arith.constant 2.000000e+00 : f32
    %121 = vector.broadcast %cst_28 : f32 to vector<4x32xf32>
    %122 = arith.mulf %121, %120 : vector<4x32xf32>
    %cst_29 = arith.constant 1.000000e+00 : f32
    %123 = vector.broadcast %cst_29 : f32 to vector<4x32xf32>
    %124 = arith.subf %122, %123 : vector<4x32xf32>
    %125 = vector.extract_strided_slice %117 {offsets = [0, 96], sizes = [4, 32], strides = [1, 1]} : vector<4x128xf32> to vector<4x32xf32>
    %126 = arith.mulf %119, %106 : vector<4x32xf32>
    %127 = arith.mulf %118, %124 : vector<4x32xf32>
    %128 = arith.addf %126, %127 : vector<4x32xf32>
    %129 = math.tanh %128 : vector<4x32xf32>
    %130 = arith.mulf %125, %129 : vector<4x32xf32>
    %131 = vector.extract_strided_slice %17 {offsets = [5, 0, 0], sizes = [1, 4, 128], strides = [1, 1, 1]} : vector<8x4x128xf32> to vector<1x4x128xf32>
    %132 = vector.shape_cast %131 : vector<1x4x128xf32> to vector<4x128xf32>
    %cst_30 = arith.constant dense<0.000000e+00> : vector<4x128xf32>
    %133 = tpu.matmul %130, %18, %cst_30 {dimension_numbers = #tpu.dot_dimension_numbers<[1], [0], [0], [1], [0, 0, 1, 1], [], []>} : vector<4x32xf32>, vector<32x128xf32>, vector<4x128xf32> -> vector<4x128xf32>
    %134 = arith.addf %132, %133 : vector<4x128xf32>
    %135 = arith.negf %134 : vector<4x128xf32>
    %136 = math.exp %135 : vector<4x128xf32>
    %cst_31 = arith.constant 1.000000e+00 : f32
    %137 = vector.broadcast %cst_31 : f32 to vector<4x128xf32>
    %138 = arith.addf %137, %136 : vector<4x128xf32>
    %139 = arith.divf %137, %138 : vector<4x128xf32>
    %140 = vector.extract_strided_slice %139 {offsets = [0, 0], sizes = [4, 32], strides = [1, 1]} : vector<4x128xf32> to vector<4x32xf32>
    %141 = vector.extract_strided_slice %139 {offsets = [0, 32], sizes = [4, 32], strides = [1, 1]} : vector<4x128xf32> to vector<4x32xf32>
    %142 = vector.extract_strided_slice %139 {offsets = [0, 64], sizes = [4, 32], strides = [1, 1]} : vector<4x128xf32> to vector<4x32xf32>
    %cst_32 = arith.constant 2.000000e+00 : f32
    %143 = vector.broadcast %cst_32 : f32 to vector<4x32xf32>
    %144 = arith.mulf %143, %142 : vector<4x32xf32>
    %cst_33 = arith.constant 1.000000e+00 : f32
    %145 = vector.broadcast %cst_33 : f32 to vector<4x32xf32>
    %146 = arith.subf %144, %145 : vector<4x32xf32>
    %147 = vector.extract_strided_slice %139 {offsets = [0, 96], sizes = [4, 32], strides = [1, 1]} : vector<4x128xf32> to vector<4x32xf32>
    %148 = arith.mulf %141, %128 : vector<4x32xf32>
    %149 = arith.mulf %140, %146 : vector<4x32xf32>
    %150 = arith.addf %148, %149 : vector<4x32xf32>
    %151 = math.tanh %150 : vector<4x32xf32>
    %152 = arith.mulf %147, %151 : vector<4x32xf32>
    %153 = vector.extract_strided_slice %17 {offsets = [6, 0, 0], sizes = [1, 4, 128], strides = [1, 1, 1]} : vector<8x4x128xf32> to vector<1x4x128xf32>
    %154 = vector.shape_cast %153 : vector<1x4x128xf32> to vector<4x128xf32>
    %cst_34 = arith.constant dense<0.000000e+00> : vector<4x128xf32>
    %155 = tpu.matmul %152, %18, %cst_34 {dimension_numbers = #tpu.dot_dimension_numbers<[1], [0], [0], [1], [0, 0, 1, 1], [], []>} : vector<4x32xf32>, vector<32x128xf32>, vector<4x128xf32> -> vector<4x128xf32>
    %156 = arith.addf %154, %155 : vector<4x128xf32>
    %157 = arith.negf %156 : vector<4x128xf32>
    %158 = math.exp %157 : vector<4x128xf32>
    %cst_35 = arith.constant 1.000000e+00 : f32
    %159 = vector.broadcast %cst_35 : f32 to vector<4x128xf32>
    %160 = arith.addf %159, %158 : vector<4x128xf32>
    %161 = arith.divf %159, %160 : vector<4x128xf32>
    %162 = vector.extract_strided_slice %161 {offsets = [0, 0], sizes = [4, 32], strides = [1, 1]} : vector<4x128xf32> to vector<4x32xf32>
    %163 = vector.extract_strided_slice %161 {offsets = [0, 32], sizes = [4, 32], strides = [1, 1]} : vector<4x128xf32> to vector<4x32xf32>
    %164 = vector.extract_strided_slice %161 {offsets = [0, 64], sizes = [4, 32], strides = [1, 1]} : vector<4x128xf32> to vector<4x32xf32>
    %cst_36 = arith.constant 2.000000e+00 : f32
    %165 = vector.broadcast %cst_36 : f32 to vector<4x32xf32>
    %166 = arith.mulf %165, %164 : vector<4x32xf32>
    %cst_37 = arith.constant 1.000000e+00 : f32
    %167 = vector.broadcast %cst_37 : f32 to vector<4x32xf32>
    %168 = arith.subf %166, %167 : vector<4x32xf32>
    %169 = vector.extract_strided_slice %161 {offsets = [0, 96], sizes = [4, 32], strides = [1, 1]} : vector<4x128xf32> to vector<4x32xf32>
    %170 = arith.mulf %163, %150 : vector<4x32xf32>
    %171 = arith.mulf %162, %168 : vector<4x32xf32>
    %172 = arith.addf %170, %171 : vector<4x32xf32>
    %173 = math.tanh %172 : vector<4x32xf32>
    %174 = arith.mulf %169, %173 : vector<4x32xf32>
    %175 = vector.extract_strided_slice %17 {offsets = [7, 0, 0], sizes = [1, 4, 128], strides = [1, 1, 1]} : vector<8x4x128xf32> to vector<1x4x128xf32>
    %176 = vector.shape_cast %175 : vector<1x4x128xf32> to vector<4x128xf32>
    %cst_38 = arith.constant dense<0.000000e+00> : vector<4x128xf32>
    %177 = tpu.matmul %174, %18, %cst_38 {dimension_numbers = #tpu.dot_dimension_numbers<[1], [0], [0], [1], [0, 0, 1, 1], [], []>} : vector<4x32xf32>, vector<32x128xf32>, vector<4x128xf32> -> vector<4x128xf32>
    %178 = arith.addf %176, %177 : vector<4x128xf32>
    %179 = arith.negf %178 : vector<4x128xf32>
    %180 = math.exp %179 : vector<4x128xf32>
    %cst_39 = arith.constant 1.000000e+00 : f32
    %181 = vector.broadcast %cst_39 : f32 to vector<4x128xf32>
    %182 = arith.addf %181, %180 : vector<4x128xf32>
    %183 = arith.divf %181, %182 : vector<4x128xf32>
    %184 = vector.extract_strided_slice %183 {offsets = [0, 0], sizes = [4, 32], strides = [1, 1]} : vector<4x128xf32> to vector<4x32xf32>
    %185 = vector.extract_strided_slice %183 {offsets = [0, 32], sizes = [4, 32], strides = [1, 1]} : vector<4x128xf32> to vector<4x32xf32>
    %186 = vector.extract_strided_slice %183 {offsets = [0, 64], sizes = [4, 32], strides = [1, 1]} : vector<4x128xf32> to vector<4x32xf32>
    %cst_40 = arith.constant 2.000000e+00 : f32
    %187 = vector.broadcast %cst_40 : f32 to vector<4x32xf32>
    %188 = arith.mulf %187, %186 : vector<4x32xf32>
    %cst_41 = arith.constant 1.000000e+00 : f32
    %189 = vector.broadcast %cst_41 : f32 to vector<4x32xf32>
    %190 = arith.subf %188, %189 : vector<4x32xf32>
    %191 = vector.extract_strided_slice %183 {offsets = [0, 96], sizes = [4, 32], strides = [1, 1]} : vector<4x128xf32> to vector<4x32xf32>
    %192 = arith.mulf %185, %172 : vector<4x32xf32>
    %193 = arith.mulf %184, %190 : vector<4x32xf32>
    %194 = arith.addf %192, %193 : vector<4x32xf32>
    %195 = math.tanh %194 : vector<4x32xf32>
    %196 = arith.mulf %191, %195 : vector<4x32xf32>
    %c0_42 = arith.constant 0 : index
    %c0_43 = arith.constant 0 : index
    %c0_44 = arith.constant 0 : index
    %197 = vector.load %arg4[%c0_42, %c0_43, %c0_44] : memref<1x4x32xf32, #tpu.memory_space<vmem>>, vector<1x4x32xf32>
    %198 = vector.shape_cast %197 : vector<1x4x32xf32> to vector<4x32xf32>
    %199 = vector.shape_cast %196 : vector<4x32xf32> to vector<1x4x32xf32>
    tpu.vector_store %arg4[%c0_42, %c0_43, %c0_44], %199 {strides = array<i32>} : memref<1x4x32xf32, #tpu.memory_space<vmem>>, vector<1x4x32xf32>,
    return
  }
}

</mosaic_0001>

<llo_original>
// kernel: tpu_custom_call.1
$region0: #{tpu_custom_call.1}
  #allocation0 [shape = 'u32[]', space=smem, size = 0x4, offset = 0x4, fixed_abs, tag = 'smem constant byte address 0x4 - core index']
  #allocation1 [shape = 'u32[144,128]{1,0:T(1,128)}', space=vmem, size = 0x12000, scoped, tag = 'internal scratch']
  %s0 = inlined_call_operand.vmem [shape: f32[8,4,2], index: 0, kind: input, shape index: {}]
  %s1 = inlined_call_operand.vmem [shape: f32[2,128], index: 1, kind: input, shape index: {}]
  %s2 = inlined_call_operand.vmem [shape: f32[1,128], index: 2, kind: input, shape index: {}]
  %s3 = inlined_call_operand.vmem [shape: f32[32,128], index: 3, kind: input, shape index: {}]
  %s4 = inlined_call_operand.hbm [shape: f32[1,4,32], index: 4, kind: output, shape index: {}]
  %s5 = sld [smem:[#allocation0]]
  $region26: #{tpu_custom_call.1} parent=0
    _
  %s7 = ssub.s32 1, %s5
  %s8 = scalar_select 0, %s7, %s5
  $region1: #{tpu_custom_call.1} parent=0
    #allocation2 [shape = 'u8[2048]{0}', space=vmem, size = 0x800, scoped, tag = 'output window, operand 0, single buffered']
    #allocation3 [shape = 's32[1]{0}', space=sflag, size = 0x4, scoped, tag = 'scoped memory for tpu_custom_call.1']
    %9 = vsyncpa [#allocation3], 0
    // Predicated region
    $region2: #{tpu_custom_call.1} parent=1 // pred_check
      _
    $region3: #{tpu_custom_call.1} parent=1 // pred_check_branch
      %11 = sbr.rel (0) target = $region5
    $region4: #{tpu_custom_call.1} parent=1 // pred_region
      _
    $region5: #{tpu_custom_call.1} parent=1 // pred_fallthru
      _
    // Predicated region
    $region6: #{tpu_custom_call.1} parent=1 // pred_check
      _
    $region7: #{tpu_custom_call.1} parent=1 // pred_check_branch
      %13 = sbr.rel (0) target = $region9
    $region8: #{tpu_custom_call.1} parent=1 // pred_region
      _
    $region9: #{tpu_custom_call.1} parent=1 // pred_fallthru
      _
    // Predicated region
    $region10: #{tpu_custom_call.1} parent=1 // pred_check
      _
    $region11: #{tpu_custom_call.1} parent=1 // pred_check_branch
      %15 = sbr.rel (0) target = $region13
    $region12: #{tpu_custom_call.1} parent=1 // pred_region
      _
    $region13: #{tpu_custom_call.1} parent=1 // pred_fallthru
      _
    // Predicated region
    $region14: #{tpu_custom_call.1} parent=1 // pred_check
      _
    $region15: #{tpu_custom_call.1} parent=1 // pred_check_branch
      %17 = sbr.rel (0) target = $region17
    $region16: #{tpu_custom_call.1} parent=1 // pred_region
      _
    $region17: #{tpu_custom_call.1} parent=1 // pred_fallthru
      _
    %v18 = vld [vmem:[%s0] sm:$0xf]
    %v19 = vld [vmem:[%s0 + $0x4] sm:$0xf]
    %v20 = vld [vmem:[%s0 + $0x8] sm:$0xf]
    %v21 = vld [vmem:[%s0 + $0xc] sm:$0xf]
    %v22 = vld [vmem:[%s0 + $0x10] sm:$0xf]
    %v23 = vld [vmem:[%s0 + $0x14] sm:$0xf]
    %v24 = vld [vmem:[%s0 + $0x18] sm:$0xf]
    %v25 = vld [vmem:[%s0 + $0x1c] sm:$0xf]
    %v26 = vld [vmem:[%s1] sm:$0x1]
    %v27 = vld [vmem:[%s1 + $0x1] sm:$0x1]
    %v28 = vld [vmem:[%s2] sm:$0x1]
    %30 = vset.pattern.permute.xlu0 0
    %31 = vperm.xlu0 %30, %v18
    %v32 = vpop.permute.xlu0 %31
    %35 = vset.pattern.permute.xlu0 0
    %36 = vperm.xlu0 %35, %v19
    %v37 = vpop.permute.xlu0 %36
    %40 = vset.pattern.permute.xlu0 0
    %41 = vperm.xlu0 %40, %v20
    %v42 = vpop.permute.xlu0 %41
    %45 = vset.pattern.permute.xlu0 0
    %46 = vperm.xlu0 %45, %v21
    %v47 = vpop.permute.xlu0 %46
    %50 = vset.pattern.permute.xlu0 0
    %51 = vperm.xlu0 %50, %v22
    %v52 = vpop.permute.xlu0 %51
    %55 = vset.pattern.permute.xlu0 0
    %56 = vperm.xlu0 %55, %v23
    %v57 = vpop.permute.xlu0 %56
    %60 = vset.pattern.permute.xlu0 0
    %61 = vperm.xlu0 %60, %v24
    %v62 = vpop.permute.xlu0 %61
    %65 = vset.pattern.permute.xlu0 0
    %66 = vperm.xlu0 %65, %v25
    %v67 = vpop.permute.xlu0 %66
    %v69 = vlaneseq
    %v70 = vshrl.u32 %v69, 7
    %v71 = vsub.s32 0, %v70
    %v72 = vrot.slane %v26, %v71
    %v73 = vmul.f32 %v32, %v72
    %v74 = vmul.f32 %v37, %v72
    %v75 = vmul.f32 %v42, %v72
    %v76 = vmul.f32 %v47, %v72
    %v77 = vmul.f32 %v52, %v72
    %v78 = vmul.f32 %v57, %v72
    %v79 = vmul.f32 %v62, %v72
    %v80 = vmul.f32 %v67, %v72
    %81 = vset.pattern.permute.xlu0 1
    %82 = vperm.xlu0 %81, %v18
    %v83 = vpop.permute.xlu0 %82
    %85 = vset.pattern.permute.xlu0 1
    %86 = vperm.xlu0 %85, %v19
    %v87 = vpop.permute.xlu0 %86
    %89 = vset.pattern.permute.xlu0 1
    %90 = vperm.xlu0 %89, %v20
    %v91 = vpop.permute.xlu0 %90
    %93 = vset.pattern.permute.xlu0 1
    %94 = vperm.xlu0 %93, %v21
    %v95 = vpop.permute.xlu0 %94
    %97 = vset.pattern.permute.xlu0 1
    %98 = vperm.xlu0 %97, %v22
    %v99 = vpop.permute.xlu0 %98
    %101 = vset.pattern.permute.xlu0 1
    %102 = vperm.xlu0 %101, %v23
    %v103 = vpop.permute.xlu0 %102
    %105 = vset.pattern.permute.xlu0 1
    %106 = vperm.xlu0 %105, %v24
    %v107 = vpop.permute.xlu0 %106
    %109 = vset.pattern.permute.xlu0 1
    %110 = vperm.xlu0 %109, %v25
    %v111 = vpop.permute.xlu0 %110
    %v113 = vlaneseq
    %v114 = vshrl.u32 %v113, 7
    %v115 = vsub.s32 0, %v114
    %v116 = vrot.slane %v27, %v115
    %v117 = vmul.f32 %v83, %v116
    %v118 = vmul.f32 %v87, %v116
    %v119 = vmul.f32 %v91, %v116
    %v120 = vmul.f32 %v95, %v116
    %v121 = vmul.f32 %v99, %v116
    %v122 = vmul.f32 %v103, %v116
    %v123 = vmul.f32 %v107, %v116
    %v124 = vmul.f32 %v111, %v116
    %v125 = vadd.f32 %v73, %v117
    %v126 = vadd.f32 %v74, %v118
    %v127 = vadd.f32 %v75, %v119
    %v128 = vadd.f32 %v76, %v120
    %v129 = vadd.f32 %v77, %v121
    %v130 = vadd.f32 %v78, %v122
    %v131 = vadd.f32 %v79, %v123
    %v132 = vadd.f32 %v80, %v124
    %v134 = vlaneseq
    %v135 = vshrl.u32 %v134, 7
    %v136 = vsub.s32 0, %v135
    %v137 = vrot.slane %v28, %v136
    %v139 = vadd.f32 %v125, %v137
    %v140 = vadd.f32 %v126, %v137
    %v141 = vadd.f32 %v127, %v137
    %v142 = vadd.f32 %v128, %v137
    %v143 = vadd.f32 %v129, %v137
    %v144 = vadd.f32 %v130, %v137
    %v145 = vadd.f32 %v131, %v137
    %v146 = vadd.f32 %v132, %v137
    %v147 = vld [vmem:[%s3] sm:$0xff]
    %v148 = vld [vmem:[%s3 + $0x8] sm:$0xff]
    %v149 = vld [vmem:[%s3 + $0x10] sm:$0xff]
    %v150 = vld [vmem:[%s3 + $0x18] sm:$0xff]
    %vm151 = vcmask 261120
    %v153 = vsel %vm151, 0.0, 0
    %155 = vmatprep.subr.mxu0 0.0
    %156 = vmatpush1.msra.mxu0 0.0
    %157 = vmatprep.subr.mxu0 0.0
    %158 = vmatpush1.msra.mxu0 0.0
    %159 = vmatprep.subr.mxu0 0.0
    %160 = vmatpush1.msra.mxu0 0.0
    %161 = vmatprep.subr.mxu0 0.0
    %162 = vmatpush1.msra.mxu0 0.0
    %163 = vmatprep.subr.mxu0 0.0
    %164 = vmatpush1.msra.mxu0 0.0
    %165 = vmatprep.subr.mxu0 0.0
    %166 = vmatpush1.msra.mxu0 0.0
    %167 = vmatprep.subr.mxu0 0.0
    %168 = vmatpush1.msra.mxu0 0.0
    %169 = vmatprep.subr.mxu0 0.0
    %170 = vmatpush1.msra.mxu0 0.0
    %171 = vmatprep.subr.mxu0 0.0
    %172 = vmatpush1.msra.mxu0 0.0
    %173 = vmatprep.subr.mxu0 0.0
    %174 = vmatpush1.msra.mxu0 0.0
    %175 = vmatprep.subr.mxu0 0.0
    %176 = vmatpush1.msra.mxu0 0.0
    %177 = vmatprep.subr.mxu0 0.0
    %178 = vmatpush1.msra.mxu0 0.0
    %179 = vmatprep.subr.mxu0 0.0
    %180 = vmatpush1.msra.mxu0 %v150
    %181 = vmatprep.subr.mxu0 0.0
    %182 = vmatpush1.msra.mxu0 %v149
    %183 = vmatprep.subr.mxu0 0.0
    %184 = vmatpush1.msra.mxu0 %v148
    %185 = vmatprep.subr.mxu0 0.0
    %186 = vmatpush1.msra.mxu0 %v147
    %187 = vmatprep.subr.mxu0 0.0
    %188 = vmatpush2.msra.mxu0 0.0
    %189 = vmatprep.subr.mxu0 0.0
    %190 = vmatpush2.msra.mxu0 0.0
    %191 = vmatprep.subr.mxu0 0.0
    %192 = vmatpush2.msra.mxu0 0.0
    %193 = vmatprep.subr.mxu0 0.0
    %194 = vmatpush2.msra.mxu0 0.0
    %195 = vmatprep.subr.mxu0 0.0
    %196 = vmatpush2.msra.mxu0 0.0
    %197 = vmatprep.subr.mxu0 0.0
    %198 = vmatpush2.msra.mxu0 0.0
    %199 = vmatprep.subr.mxu0 0.0
    %200 = vmatpush2.msra.mxu0 0.0
    %201 = vmatprep.subr.mxu0 0.0
    %202 = vmatpush2.msra.mxu0 0.0
    %203 = vmatprep.subr.mxu0 0.0
    %204 = vmatpush2.msra.mxu0 0.0
    %205 = vmatprep.subr.mxu0 0.0
    %206 = vmatpush2.msra.mxu0 0.0
    %207 = vmatprep.subr.mxu0 0.0
    %208 = vmatpush2.msra.mxu0 0.0
    %209 = vmatprep.subr.mxu0 0.0
    %210 = vmatpush2.msra.mxu0 0.0
    %211 = vmatprep.subr.mxu0 0.0
    %212 = vmatpush2.msra.mxu0 0.0
    %213 = vmatprep.subr.mxu0 0.0
    %214 = vmatpush2.msra.mxu0 0.0
    %215 = vmatprep.subr.mxu0 0.0
    %216 = vmatpush2.msra.mxu0 0.0
    %217 = vmatprep.subr.mxu0 0.0
    %218 = vmatpush2.msra.mxu0 0.0
    %219 = vmatprep.mubr.f32.mxu0 0.0
    %220 = vmatmul.mubr.f32.gmra.mxu0 %v153
    %v221 = vpop.f32.mrf.mxu0
    %v222 = vadd.f32 0.0, %v221
    %v223 = vpop.f32.mrf.mxu0
    %224 = vdwg.mxu0
    %v225 = vadd.f32 %v139, %v222
    %v226 = vxor.u32 %v225, 2147483648
    %v227 = vmul.f32 %v226, 1.442695
    %v228 = vpow.pop %v227
    %v229 = vadd.f32 %v228, 1.0
    %v230 = vrcp.pop %v229
    %v231 = vmul.f32 1.0, %v230
    %v232 = vmul.f32 %v231, 2.0
    %v233 = vsub.f32 %v232, 1.0
    %v234 = vmul.f32 %v231, 0.0
    %236 = vrot.lane.b32.xlu0 %v233, 64
    %v237 = vpop.permute.xlu0 %236
    %v239 = vmul.f32 %v231, %v237
    %241 = vrot.lane.b32.xlu0 %v239, 32
    %v242 = vpop.permute.xlu0 %241
    %v244 = vadd.f32 %v234, %v242
    %v245 = vtanh.pop %v244
    %247 = vrot.lane.b32.xlu0 %v245, 64
    %v248 = vpop.permute.xlu0 %247
    %v250 = vmul.f32 %v231, %v248
    %252 = vrot.lane.b32.xlu0 %v250, 32
    %v253 = vpop.permute.xlu0 %252
    %v254 = vsel %vm151, %v253, 0
    %256 = vmatprep.subr.mxu0 0.0
    %257 = vmatpush1.msra.mxu0 0.0
    %258 = vmatprep.subr.mxu0 0.0
    %259 = vmatpush1.msra.mxu0 0.0
    %260 = vmatprep.subr.mxu0 0.0
    %261 = vmatpush1.msra.mxu0 0.0
    %262 = vmatprep.subr.mxu0 0.0
    %263 = vmatpush1.msra.mxu0 0.0
    %264 = vmatprep.subr.mxu0 0.0
    %265 = vmatpush1.msra.mxu0 0.0
    %266 = vmatprep.subr.mxu0 0.0
    %267 = vmatpush1.msra.mxu0 0.0
    %268 = vmatprep.subr.mxu0 0.0
    %269 = vmatpush1.msra.mxu0 0.0
    %270 = vmatprep.subr.mxu0 0.0
    %271 = vmatpush1.msra.mxu0 0.0
    %272 = vmatprep.subr.mxu0 0.0
    %273 = vmatpush1.msra.mxu0 0.0
    %274 = vmatprep.subr.mxu0 0.0
    %275 = vmatpush1.msra.mxu0 0.0
    %276 = vmatprep.subr.mxu0 0.0
    %277 = vmatpush1.msra.mxu0 0.0
    %278 = vmatprep.subr.mxu0 0.0
    %279 = vmatpush1.msra.mxu0 0.0
    %280 = vmatprep.subr.mxu0 0.0
    %281 = vmatpush1.msra.mxu0 %v150
    %282 = vmatprep.subr.mxu0 0.0
    %283 = vmatpush1.msra.mxu0 %v149
    %284 = vmatprep.subr.mxu0 0.0
    %285 = vmatpush1.msra.mxu0 %v148
    %286 = vmatprep.subr.mxu0 0.0
    %287 = vmatpush1.msra.mxu0 %v147
    %288 = vmatprep.subr.mxu0 0.0
    %289 = vmatpush2.msra.mxu0 0.0
    %290 = vmatprep.subr.mxu0 0.0
    %291 = vmatpush2.msra.mxu0 0.0
    %292 = vmatprep.subr.mxu0 0.0
    %293 = vmatpush2.msra.mxu0 0.0
    %294 = vmatprep.subr.mxu0 0.0
    %295 = vmatpush2.msra.mxu0 0.0
    %296 = vmatprep.subr.mxu0 0.0
    %297 = vmatpush2.msra.mxu0 0.0
    %298 = vmatprep.subr.mxu0 0.0
    %299 = vmatpush2.msra.mxu0 0.0
    %300 = vmatprep.subr.mxu0 0.0
    %301 = vmatpush2.msra.mxu0 0.0
    %302 = vmatprep.subr.mxu0 0.0
    %303 = vmatpush2.msra.mxu0 0.0
    %304 = vmatprep.subr.mxu0 0.0
    %305 = vmatpush2.msra.mxu0 0.0
    %306 = vmatprep.subr.mxu0 0.0
    %307 = vmatpush2.msra.mxu0 0.0
    %308 = vmatprep.subr.mxu0 0.0
    %309 = vmatpush2.msra.mxu0 0.0
    %310 = vmatprep.subr.mxu0 0.0
    %311 = vmatpush2.msra.mxu0 0.0
    %312 = vmatprep.subr.mxu0 0.0
    %313 = vmatpush2.msra.mxu0 0.0
    %314 = vmatprep.subr.mxu0 0.0
    %315 = vmatpush2.msra.mxu0 0.0
    %316 = vmatprep.subr.mxu0 0.0
    %317 = vmatpush2.msra.mxu0 0.0
    %318 = vmatprep.subr.mxu0 0.0
    %319 = vmatpush2.msra.mxu0 0.0
    %320 = vmatprep.mubr.f32.mxu0 0.0
    %321 = vmatmul.mubr.f32.gmra.mxu0 %v254
    %v322 = vpop.f32.mrf.mxu0
    %v323 = vadd.f32 0.0, %v322
    %v324 = vpop.f32.mrf.mxu0
    %325 = vdwg.mxu0
    %v326 = vadd.f32 %v140, %v323
    %v327 = vxor.u32 %v326, 2147483648
    %v328 = vmul.f32 %v327, 1.442695
    %v329 = vpow.pop %v328
    %v330 = vadd.f32 %v329, 1.0
    %v331 = vrcp.pop %v330
    %v332 = vmul.f32 1.0, %v331
    %v333 = vmul.f32 %v332, 2.0
    %v334 = vsub.f32 %v333, 1.0
    %v335 = vmul.f32 %v332, %v244
    %337 = vrot.lane.b32.xlu0 %v334, 64
    %v338 = vpop.permute.xlu0 %337
    %v340 = vmul.f32 %v332, %v338
    %342 = vrot.lane.b32.xlu0 %v340, 32
    %v343 = vpop.permute.xlu0 %342
    %v345 = vadd.f32 %v335, %v343
    %v346 = vtanh.pop %v345
    %348 = vrot.lane.b32.xlu0 %v346, 64
    %v349 = vpop.permute.xlu0 %348
    %v351 = vmul.f32 %v332, %v349
    %353 = vrot.lane.b32.xlu0 %v351, 32
    %v354 = vpop.permute.xlu0 %353
    %v355 = vsel %vm151, %v354, 0
    %357 = vmatprep.subr.mxu0 0.0
    %358 = vmatpush1.msra.mxu0 0.0
    %359 = vmatprep.subr.mxu0 0.0
    %360 = vmatpush1.msra.mxu0 0.0
    %361 = vmatprep.subr.mxu0 0.0
    %362 = vmatpush1.msra.mxu0 0.0
    %363 = vmatprep.subr.mxu0 0.0
    %364 = vmatpush1.msra.mxu0 0.0
    %365 = vmatprep.subr.mxu0 0.0
    %366 = vmatpush1.msra.mxu0 0.0
    %367 = vmatprep.subr.mxu0 0.0
    %368 = vmatpush1.msra.mxu0 0.0
    %369 = vmatprep.subr.mxu0 0.0
    %370 = vmatpush1.msra.mxu0 0.0
    %371 = vmatprep.subr.mxu0 0.0
    %372 = vmatpush1.msra.mxu0 0.0
    %373 = vmatprep.subr.mxu0 0.0
    %374 = vmatpush1.msra.mxu0 0.0
    %375 = vmatprep.subr.mxu0 0.0
    %376 = vmatpush1.msra.mxu0 0.0
    %377 = vmatprep.subr.mxu0 0.0
    %378 = vmatpush1.msra.mxu0 0.0
    %379 = vmatprep.subr.mxu0 0.0
    %380 = vmatpush1.msra.mxu0 0.0
    %381 = vmatprep.subr.mxu0 0.0
    %382 = vmatpush1.msra.mxu0 %v150
    %383 = vmatprep.subr.mxu0 0.0
    %384 = vmatpush1.msra.mxu0 %v149
    %385 = vmatprep.subr.mxu0 0.0
    %386 = vmatpush1.msra.mxu0 %v148
    %387 = vmatprep.subr.mxu0 0.0
    %388 = vmatpush1.msra.mxu0 %v147
    %389 = vmatprep.subr.mxu0 0.0
    %390 = vmatpush2.msra.mxu0 0.0
    %391 = vmatprep.subr.mxu0 0.0
    %392 = vmatpush2.msra.mxu0 0.0
    %393 = vmatprep.subr.mxu0 0.0
    %394 = vmatpush2.msra.mxu0 0.0
    %395 = vmatprep.subr.mxu0 0.0
    %396 = vmatpush2.msra.mxu0 0.0
    %397 = vmatprep.subr.mxu0 0.0
    %398 = vmatpush2.msra.mxu0 0.0
    %399 = vmatprep.subr.mxu0 0.0
    %400 = vmatpush2.msra.mxu0 0.0
    %401 = vmatprep.subr.mxu0 0.0
    %402 = vmatpush2.msra.mxu0 0.0
    %403 = vmatprep.subr.mxu0 0.0
    %404 = vmatpush2.msra.mxu0 0.0
    %405 = vmatprep.subr.mxu0 0.0
    %406 = vmatpush2.msra.mxu0 0.0
    %407 = vmatprep.subr.mxu0 0.0
    %408 = vmatpush2.msra.mxu0 0.0
    %409 = vmatprep.subr.mxu0 0.0
    %410 = vmatpush2.msra.mxu0 0.0
    %411 = vmatprep.subr.mxu0 0.0
    %412 = vmatpush2.msra.mxu0 0.0
    %413 = vmatprep.subr.mxu0 0.0
    %414 = vmatpush2.msra.mxu0 0.0
    %415 = vmatprep.subr.mxu0 0.0
    %416 = vmatpush2.msra.mxu0 0.0
    %417 = vmatprep.subr.mxu0 0.0
    %418 = vmatpush2.msra.mxu0 0.0
    %419 = vmatprep.subr.mxu0 0.0
    %420 = vmatpush2.msra.mxu0 0.0
    %421 = vmatprep.mubr.f32.mxu0 0.0
    %422 = vmatmul.mubr.f32.gmra.mxu0 %v355
    %v423 = vpop.f32.mrf.mxu0
    %v424 = vadd.f32 0.0, %v423
    %v425 = vpop.f32.mrf.mxu0
    %426 = vdwg.mxu0
    %v427 = vadd.f32 %v141, %v424
    %v428 = vxor.u32 %v427, 2147483648
    %v429 = vmul.f32 %v428, 1.442695
    %v430 = vpow.pop %v429
    %v431 = vadd.f32 %v430, 1.0
    %v432 = vrcp.pop %v431
    %v433 = vmul.f32 1.0, %v432
    %v434 = vmul.f32 %v433, 2.0
    %v435 = vsub.f32 %v434, 1.0
    %v436 = vmul.f32 %v433, %v345
    %438 = vrot.lane.b32.xlu0 %v435, 64
    %v439 = vpop.permute.xlu0 %438
    %v441 = vmul.f32 %v433, %v439
    %443 = vrot.lane.b32.xlu0 %v441, 32
    %v444 = vpop.permute.xlu0 %443
    %v446 = vadd.f32 %v436, %v444
    %v447 = vtanh.pop %v446
    %449 = vrot.lane.b32.xlu0 %v447, 64
    %v450 = vpop.permute.xlu0 %449
    %v452 = vmul.f32 %v433, %v450
    %454 = vrot.lane.b32.xlu0 %v452, 32
    %v455 = vpop.permute.xlu0 %454
    %v456 = vsel %vm151, %v455, 0
    %458 = vmatprep.subr.mxu0 0.0
    %459 = vmatpush1.msra.mxu0 0.0
    %460 = vmatprep.subr.mxu0 0.0
    %461 = vmatpush1.msra.mxu0 0.0
    %462 = vmatprep.subr.mxu0 0.0
    %463 = vmatpush1.msra.mxu0 0.0
    %464 = vmatprep.subr.mxu0 0.0
    %465 = vmatpush1.msra.mxu0 0.0
    %466 = vmatprep.subr.mxu0 0.0
    %467 = vmatpush1.msra.mxu0 0.0
    %468 = vmatprep.subr.mxu0 0.0
    %469 = vmatpush1.msra.mxu0 0.0
    %470 = vmatprep.subr.mxu0 0.0
    %471 = vmatpush1.msra.mxu0 0.0
    %472 = vmatprep.subr.mxu0 0.0
    %473 = vmatpush1.msra.mxu0 0.0
    %474 = vmatprep.subr.mxu0 0.0
    %475 = vmatpush1.msra.mxu0 0.0
    %476 = vmatprep.subr.mxu0 0.0
    %477 = vmatpush1.msra.mxu0 0.0
    %478 = vmatprep.subr.mxu0 0.0
    %479 = vmatpush1.msra.mxu0 0.0
    %480 = vmatprep.subr.mxu0 0.0
    %481 = vmatpush1.msra.mxu0 0.0
    %482 = vmatprep.subr.mxu0 0.0
    %483 = vmatpush1.msra.mxu0 %v150
    %484 = vmatprep.subr.mxu0 0.0
    %485 = vmatpush1.msra.mxu0 %v149
    %486 = vmatprep.subr.mxu0 0.0
    %487 = vmatpush1.msra.mxu0 %v148
    %488 = vmatprep.subr.mxu0 0.0
    %489 = vmatpush1.msra.mxu0 %v147
    %490 = vmatprep.subr.mxu0 0.0
    %491 = vmatpush2.msra.mxu0 0.0
    %492 = vmatprep.subr.mxu0 0.0
    %493 = vmatpush2.msra.mxu0 0.0
    %494 = vmatprep.subr.mxu0 0.0
    %495 = vmatpush2.msra.mxu0 0.0
    %496 = vmatprep.subr.mxu0 0.0
    %497 = vmatpush2.msra.mxu0 0.0
    %498 = vmatprep.subr.mxu0 0.0
    %499 = vmatpush2.msra.mxu0 0.0
    %500 = vmatprep.subr.mxu0 0.0
    %501 = vmatpush2.msra.mxu0 0.0
    %502 = vmatprep.subr.mxu0 0.0
    %503 = vmatpush2.msra.mxu0 0.0
    %504 = vmatprep.subr.mxu0 0.0
    %505 = vmatpush2.msra.mxu0 0.0
    %506 = vmatprep.subr.mxu0 0.0
    %507 = vmatpush2.msra.mxu0 0.0
    %508 = vmatprep.subr.mxu0 0.0
    %509 = vmatpush2.msra.mxu0 0.0
    %510 = vmatprep.subr.mxu0 0.0
    %511 = vmatpush2.msra.mxu0 0.0
    %512 = vmatprep.subr.mxu0 0.0
    %513 = vmatpush2.msra.mxu0 0.0
    %514 = vmatprep.subr.mxu0 0.0
    %515 = vmatpush2.msra.mxu0 0.0
    %516 = vmatprep.subr.mxu0 0.0
    %517 = vmatpush2.msra.mxu0 0.0
    %518 = vmatprep.subr.mxu0 0.0
    %519 = vmatpush2.msra.mxu0 0.0
    %520 = vmatprep.subr.mxu0 0.0
    %521 = vmatpush2.msra.mxu0 0.0
    %522 = vmatprep.mubr.f32.mxu0 0.0
    %523 = vmatmul.mubr.f32.gmra.mxu0 %v456
    %v524 = vpop.f32.mrf.mxu0
    %v525 = vadd.f32 0.0, %v524
    %v526 = vpop.f32.mrf.mxu0
    %527 = vdwg.mxu0
    %v528 = vadd.f32 %v142, %v525
    %v529 = vxor.u32 %v528, 2147483648
    %v530 = vmul.f32 %v529, 1.442695
    %v531 = vpow.pop %v530
    %v532 = vadd.f32 %v531, 1.0
    %v533 = vrcp.pop %v532
    %v534 = vmul.f32 1.0, %v533
    %v535 = vmul.f32 %v534, 2.0
    %v536 = vsub.f32 %v535, 1.0
    %v537 = vmul.f32 %v534, %v446
    %539 = vrot.lane.b32.xlu0 %v536, 64
    %v540 = vpop.permute.xlu0 %539
    %v542 = vmul.f32 %v534, %v540
    %544 = vrot.lane.b32.xlu0 %v542, 32
    %v545 = vpop.permute.xlu0 %544
    %v547 = vadd.f32 %v537, %v545
    %v548 = vtanh.pop %v547
    %550 = vrot.lane.b32.xlu0 %v548, 64
    %v551 = vpop.permute.xlu0 %550
    %v553 = vmul.f32 %v534, %v551
    %555 = vrot.lane.b32.xlu0 %v553, 32
    %v556 = vpop.permute.xlu0 %555
    %v557 = vsel %vm151, %v556, 0
    %559 = vmatprep.subr.mxu0 0.0
    %560 = vmatpush1.msra.mxu0 0.0
    %561 = vmatprep.subr.mxu0 0.0
    %562 = vmatpush1.msra.mxu0 0.0
    %563 = vmatprep.subr.mxu0 0.0
    %564 = vmatpush1.msra.mxu0 0.0
    %565 = vmatprep.subr.mxu0 0.0
    %566 = vmatpush1.msra.mxu0 0.0
    %567 = vmatprep.subr.mxu0 0.0
    %568 = vmatpush1.msra.mxu0 0.0
    %569 = vmatprep.subr.mxu0 0.0
    %570 = vmatpush1.msra.mxu0 0.0
    %571 = vmatprep.subr.mxu0 0.0
    %572 = vmatpush1.msra.mxu0 0.0
    %573 = vmatprep.subr.mxu0 0.0
    %574 = vmatpush1.msra.mxu0 0.0
    %575 = vmatprep.subr.mxu0 0.0
    %576 = vmatpush1.msra.mxu0 0.0
    %577 = vmatprep.subr.mxu0 0.0
    %578 = vmatpush1.msra.mxu0 0.0
    %579 = vmatprep.subr.mxu0 0.0
    %580 = vmatpush1.msra.mxu0 0.0
    %581 = vmatprep.subr.mxu0 0.0
    %582 = vmatpush1.msra.mxu0 0.0
    %583 = vmatprep.subr.mxu0 0.0
    %584 = vmatpush1.msra.mxu0 %v150
    %585 = vmatprep.subr.mxu0 0.0
    %586 = vmatpush1.msra.mxu0 %v149
    %587 = vmatprep.subr.mxu0 0.0
    %588 = vmatpush1.msra.mxu0 %v148
    %589 = vmatprep.subr.mxu0 0.0
    %590 = vmatpush1.msra.mxu0 %v147
    %591 = vmatprep.subr.mxu0 0.0
    %592 = vmatpush2.msra.mxu0 0.0
    %593 = vmatprep.subr.mxu0 0.0
    %594 = vmatpush2.msra.mxu0 0.0
    %595 = vmatprep.subr.mxu0 0.0
    %596 = vmatpush2.msra.mxu0 0.0
    %597 = vmatprep.subr.mxu0 0.0
    %598 = vmatpush2.msra.mxu0 0.0
    %599 = vmatprep.subr.mxu0 0.0
    %600 = vmatpush2.msra.mxu0 0.0
    %601 = vmatprep.subr.mxu0 0.0
    %602 = vmatpush2.msra.mxu0 0.0
    %603 = vmatprep.subr.mxu0 0.0
    %604 = vmatpush2.msra.mxu0 0.0
    %605 = vmatprep.subr.mxu0 0.0
    %606 = vmatpush2.msra.mxu0 0.0
    %607 = vmatprep.subr.mxu0 0.0
    %608 = vmatpush2.msra.mxu0 0.0
    %609 = vmatprep.subr.mxu0 0.0
    %610 = vmatpush2.msra.mxu0 0.0
    %611 = vmatprep.subr.mxu0 0.0
    %612 = vmatpush2.msra.mxu0 0.0
    %613 = vmatprep.subr.mxu0 0.0
    %614 = vmatpush2.msra.mxu0 0.0
    %615 = vmatprep.subr.mxu0 0.0
    %616 = vmatpush2.msra.mxu0 0.0
    %617 = vmatprep.subr.mxu0 0.0
    %618 = vmatpush2.msra.mxu0 0.0
    %619 = vmatprep.subr.mxu0 0.0
    %620 = vmatpush2.msra.mxu0 0.0
    %621 = vmatprep.subr.mxu0 0.0
    %622 = vmatpush2.msra.mxu0 0.0
    %623 = vmatprep.mubr.f32.mxu0 0.0
    %624 = vmatmul.mubr.f32.gmra.mxu0 %v557
    %v625 = vpop.f32.mrf.mxu0
    %v626 = vadd.f32 0.0, %v625
    %v627 = vpop.f32.mrf.mxu0
    %628 = vdwg.mxu0
    %v629 = vadd.f32 %v143, %v626
    %v630 = vxor.u32 %v629, 2147483648
    %v631 = vmul.f32 %v630, 1.442695
    %v632 = vpow.pop %v631
    %v633 = vadd.f32 %v632, 1.0
    %v634 = vrcp.pop %v633
    %v635 = vmul.f32 1.0, %v634
    %v636 = vmul.f32 %v635, 2.0
    %v637 = vsub.f32 %v636, 1.0
    %v638 = vmul.f32 %v635, %v547
    %640 = vrot.lane.b32.xlu0 %v637, 64
    %v641 = vpop.permute.xlu0 %640
    %v643 = vmul.f32 %v635, %v641
    %645 = vrot.lane.b32.xlu0 %v643, 32
    %v646 = vpop.permute.xlu0 %645
    %v648 = vadd.f32 %v638, %v646
    %v649 = vtanh.pop %v648
    %651 = vrot.lane.b32.xlu0 %v649, 64
    %v652 = vpop.permute.xlu0 %651
    %v654 = vmul.f32 %v635, %v652
    %656 = vrot.lane.b32.xlu0 %v654, 32
    %v657 = vpop.permute.xlu0 %656
    %v658 = vsel %vm151, %v657, 0
    %660 = vmatprep.subr.mxu0 0.0
    %661 = vmatpush1.msra.mxu0 0.0
    %662 = vmatprep.subr.mxu0 0.0
    %663 = vmatpush1.msra.mxu0 0.0
    %664 = vmatprep.subr.mxu0 0.0
    %665 = vmatpush1.msra.mxu0 0.0
    %666 = vmatprep.subr.mxu0 0.0
    %667 = vmatpush1.msra.mxu0 0.0
    %668 = vmatprep.subr.mxu0 0.0
    %669 = vmatpush1.msra.mxu0 0.0
    %670 = vmatprep.subr.mxu0 0.0
    %671 = vmatpush1.msra.mxu0 0.0
    %672 = vmatprep.subr.mxu0 0.0
    %673 = vmatpush1.msra.mxu0 0.0
    %674 = vmatprep.subr.mxu0 0.0
    %675 = vmatpush1.msra.mxu0 0.0
    %676 = vmatprep.subr.mxu0 0.0
    %677 = vmatpush1.msra.mxu0 0.0
    %678 = vmatprep.subr.mxu0 0.0
    %679 = vmatpush1.msra.mxu0 0.0
    %680 = vmatprep.subr.mxu0 0.0
    %681 = vmatpush1.msra.mxu0 0.0
    %682 = vmatprep.subr.mxu0 0.0
    %683 = vmatpush1.msra.mxu0 0.0
    %684 = vmatprep.subr.mxu0 0.0
    %685 = vmatpush1.msra.mxu0 %v150
    %686 = vmatprep.subr.mxu0 0.0
    %687 = vmatpush1.msra.mxu0 %v149
    %688 = vmatprep.subr.mxu0 0.0
    %689 = vmatpush1.msra.mxu0 %v148
    %690 = vmatprep.subr.mxu0 0.0
    %691 = vmatpush1.msra.mxu0 %v147
    %692 = vmatprep.subr.mxu0 0.0
    %693 = vmatpush2.msra.mxu0 0.0
    %694 = vmatprep.subr.mxu0 0.0
    %695 = vmatpush2.msra.mxu0 0.0
    %696 = vmatprep.subr.mxu0 0.0
    %697 = vmatpush2.msra.mxu0 0.0
    %698 = vmatprep.subr.mxu0 0.0
    %699 = vmatpush2.msra.mxu0 0.0
    %700 = vmatprep.subr.mxu0 0.0
    %701 = vmatpush2.msra.mxu0 0.0
    %702 = vmatprep.subr.mxu0 0.0
    %703 = vmatpush2.msra.mxu0 0.0
    %704 = vmatprep.subr.mxu0 0.0
    %705 = vmatpush2.msra.mxu0 0.0
    %706 = vmatprep.subr.mxu0 0.0
    %707 = vmatpush2.msra.mxu0 0.0
    %708 = vmatprep.subr.mxu0 0.0
    %709 = vmatpush2.msra.mxu0 0.0
    %710 = vmatprep.subr.mxu0 0.0
    %711 = vmatpush2.msra.mxu0 0.0
    %712 = vmatprep.subr.mxu0 0.0
    %713 = vmatpush2.msra.mxu0 0.0
    %714 = vmatprep.subr.mxu0 0.0
    %715 = vmatpush2.msra.mxu0 0.0
    %716 = vmatprep.subr.mxu0 0.0
    %717 = vmatpush2.msra.mxu0 0.0
    %718 = vmatprep.subr.mxu0 0.0
    %719 = vmatpush2.msra.mxu0 0.0
    %720 = vmatprep.subr.mxu0 0.0
    %721 = vmatpush2.msra.mxu0 0.0
    %722 = vmatprep.subr.mxu0 0.0
    %723 = vmatpush2.msra.mxu0 0.0
    %724 = vmatprep.mubr.f32.mxu0 0.0
    %725 = vmatmul.mubr.f32.gmra.mxu0 %v658
    %v726 = vpop.f32.mrf.mxu0
    %v727 = vadd.f32 0.0, %v726
    %v728 = vpop.f32.mrf.mxu0
    %729 = vdwg.mxu0
    %v730 = vadd.f32 %v144, %v727
    %v731 = vxor.u32 %v730, 2147483648
    %v732 = vmul.f32 %v731, 1.442695
    %v733 = vpow.pop %v732
    %v734 = vadd.f32 %v733, 1.0
    %v735 = vrcp.pop %v734
    %v736 = vmul.f32 1.0, %v735
    %v737 = vmul.f32 %v736, 2.0
    %v738 = vsub.f32 %v737, 1.0
    %v739 = vmul.f32 %v736, %v648
    %741 = vrot.lane.b32.xlu0 %v738, 64
    %v742 = vpop.permute.xlu0 %741
    %v744 = vmul.f32 %v736, %v742
    %746 = vrot.lane.b32.xlu0 %v744, 32
    %v747 = vpop.permute.xlu0 %746
    %v749 = vadd.f32 %v739, %v747
    %v750 = vtanh.pop %v749
    %752 = vrot.lane.b32.xlu0 %v750, 64
    %v753 = vpop.permute.xlu0 %752
    %v755 = vmul.f32 %v736, %v753
    %757 = vrot.lane.b32.xlu0 %v755, 32
    %v758 = vpop.permute.xlu0 %757
    %v759 = vsel %vm151, %v758, 0
    %761 = vmatprep.subr.mxu0 0.0
    %762 = vmatpush1.msra.mxu0 0.0
    %763 = vmatprep.subr.mxu0 0.0
    %764 = vmatpush1.msra.mxu0 0.0
    %765 = vmatprep.subr.mxu0 0.0
    %766 = vmatpush1.msra.mxu0 0.0
    %767 = vmatprep.subr.mxu0 0.0
    %768 = vmatpush1.msra.mxu0 0.0
    %769 = vmatprep.subr.mxu0 0.0
    %770 = vmatpush1.msra.mxu0 0.0
    %771 = vmatprep.subr.mxu0 0.0
    %772 = vmatpush1.msra.mxu0 0.0
    %773 = vmatprep.subr.mxu0 0.0
    %774 = vmatpush1.msra.mxu0 0.0
    %775 = vmatprep.subr.mxu0 0.0
    %776 = vmatpush1.msra.mxu0 0.0
    %777 = vmatprep.subr.mxu0 0.0
    %778 = vmatpush1.msra.mxu0 0.0
    %779 = vmatprep.subr.mxu0 0.0
    %780 = vmatpush1.msra.mxu0 0.0
    %781 = vmatprep.subr.mxu0 0.0
    %782 = vmatpush1.msra.mxu0 0.0
    %783 = vmatprep.subr.mxu0 0.0
    %784 = vmatpush1.msra.mxu0 0.0
    %785 = vmatprep.subr.mxu0 0.0
    %786 = vmatpush1.msra.mxu0 %v150
    %787 = vmatprep.subr.mxu0 0.0
    %788 = vmatpush1.msra.mxu0 %v149
    %789 = vmatprep.subr.mxu0 0.0
    %790 = vmatpush1.msra.mxu0 %v148
    %791 = vmatprep.subr.mxu0 0.0
    %792 = vmatpush1.msra.mxu0 %v147
    %793 = vmatprep.subr.mxu0 0.0
    %794 = vmatpush2.msra.mxu0 0.0
    %795 = vmatprep.subr.mxu0 0.0
    %796 = vmatpush2.msra.mxu0 0.0
    %797 = vmatprep.subr.mxu0 0.0
    %798 = vmatpush2.msra.mxu0 0.0
    %799 = vmatprep.subr.mxu0 0.0
    %800 = vmatpush2.msra.mxu0 0.0
    %801 = vmatprep.subr.mxu0 0.0
    %802 = vmatpush2.msra.mxu0 0.0
    %803 = vmatprep.subr.mxu0 0.0
    %804 = vmatpush2.msra.mxu0 0.0
    %805 = vmatprep.subr.mxu0 0.0
    %806 = vmatpush2.msra.mxu0 0.0
    %807 = vmatprep.subr.mxu0 0.0
    %808 = vmatpush2.msra.mxu0 0.0
    %809 = vmatprep.subr.mxu0 0.0
    %810 = vmatpush2.msra.mxu0 0.0
    %811 = vmatprep.subr.mxu0 0.0
    %812 = vmatpush2.msra.mxu0 0.0
    %813 = vmatprep.subr.mxu0 0.0
    %814 = vmatpush2.msra.mxu0 0.0
    %815 = vmatprep.subr.mxu0 0.0
    %816 = vmatpush2.msra.mxu0 0.0
    %817 = vmatprep.subr.mxu0 0.0
    %818 = vmatpush2.msra.mxu0 0.0
    %819 = vmatprep.subr.mxu0 0.0
    %820 = vmatpush2.msra.mxu0 0.0
    %821 = vmatprep.subr.mxu0 0.0
    %822 = vmatpush2.msra.mxu0 0.0
    %823 = vmatprep.subr.mxu0 0.0
    %824 = vmatpush2.msra.mxu0 0.0
    %825 = vmatprep.mubr.f32.mxu0 0.0
    %826 = vmatmul.mubr.f32.gmra.mxu0 %v759
    %v827 = vpop.f32.mrf.mxu0
    %v828 = vadd.f32 0.0, %v827
    %v829 = vpop.f32.mrf.mxu0
    %830 = vdwg.mxu0
    %v831 = vadd.f32 %v145, %v828
    %v832 = vxor.u32 %v831, 2147483648
    %v833 = vmul.f32 %v832, 1.442695
    %v834 = vpow.pop %v833
    %v835 = vadd.f32 %v834, 1.0
    %v836 = vrcp.pop %v835
    %v837 = vmul.f32 1.0, %v836
    %v838 = vmul.f32 %v837, 2.0
    %v839 = vsub.f32 %v838, 1.0
    %v840 = vmul.f32 %v837, %v749
    %842 = vrot.lane.b32.xlu0 %v839, 64
    %v843 = vpop.permute.xlu0 %842
    %v845 = vmul.f32 %v837, %v843
    %847 = vrot.lane.b32.xlu0 %v845, 32
    %v848 = vpop.permute.xlu0 %847
    %v850 = vadd.f32 %v840, %v848
    %v851 = vtanh.pop %v850
    %853 = vrot.lane.b32.xlu0 %v851, 64
    %v854 = vpop.permute.xlu0 %853
    %v856 = vmul.f32 %v837, %v854
    %858 = vrot.lane.b32.xlu0 %v856, 32
    %v859 = vpop.permute.xlu0 %858
    %v860 = vsel %vm151, %v859, 0
    %862 = vmatprep.subr.mxu0 0.0
    %863 = vmatpush1.msra.mxu0 0.0
    %864 = vmatprep.subr.mxu0 0.0
    %865 = vmatpush1.msra.mxu0 0.0
    %866 = vmatprep.subr.mxu0 0.0
    %867 = vmatpush1.msra.mxu0 0.0
    %868 = vmatprep.subr.mxu0 0.0
    %869 = vmatpush1.msra.mxu0 0.0
    %870 = vmatprep.subr.mxu0 0.0
    %871 = vmatpush1.msra.mxu0 0.0
    %872 = vmatprep.subr.mxu0 0.0
    %873 = vmatpush1.msra.mxu0 0.0
    %874 = vmatprep.subr.mxu0 0.0
    %875 = vmatpush1.msra.mxu0 0.0
    %876 = vmatprep.subr.mxu0 0.0
    %877 = vmatpush1.msra.mxu0 0.0
    %878 = vmatprep.subr.mxu0 0.0
    %879 = vmatpush1.msra.mxu0 0.0
    %880 = vmatprep.subr.mxu0 0.0
    %881 = vmatpush1.msra.mxu0 0.0
    %882 = vmatprep.subr.mxu0 0.0
    %883 = vmatpush1.msra.mxu0 0.0
    %884 = vmatprep.subr.mxu0 0.0
    %885 = vmatpush1.msra.mxu0 0.0
    %886 = vmatprep.subr.mxu0 0.0
    %887 = vmatpush1.msra.mxu0 %v150
    %888 = vmatprep.subr.mxu0 0.0
    %889 = vmatpush1.msra.mxu0 %v149
    %890 = vmatprep.subr.mxu0 0.0
    %891 = vmatpush1.msra.mxu0 %v148
    %892 = vmatprep.subr.mxu0 0.0
    %893 = vmatpush1.msra.mxu0 %v147
    %894 = vmatprep.subr.mxu0 0.0
    %895 = vmatpush2.msra.mxu0 0.0
    %896 = vmatprep.subr.mxu0 0.0
    %897 = vmatpush2.msra.mxu0 0.0
    %898 = vmatprep.subr.mxu0 0.0
    %899 = vmatpush2.msra.mxu0 0.0
    %900 = vmatprep.subr.mxu0 0.0
    %901 = vmatpush2.msra.mxu0 0.0
    %902 = vmatprep.subr.mxu0 0.0
    %903 = vmatpush2.msra.mxu0 0.0
    %904 = vmatprep.subr.mxu0 0.0
    %905 = vmatpush2.msra.mxu0 0.0
    %906 = vmatprep.subr.mxu0 0.0
    %907 = vmatpush2.msra.mxu0 0.0
    %908 = vmatprep.subr.mxu0 0.0
    %909 = vmatpush2.msra.mxu0 0.0
    %910 = vmatprep.subr.mxu0 0.0
    %911 = vmatpush2.msra.mxu0 0.0
    %912 = vmatprep.subr.mxu0 0.0
    %913 = vmatpush2.msra.mxu0 0.0
    %914 = vmatprep.subr.mxu0 0.0
    %915 = vmatpush2.msra.mxu0 0.0
    %916 = vmatprep.subr.mxu0 0.0
    %917 = vmatpush2.msra.mxu0 0.0
    %918 = vmatprep.subr.mxu0 0.0
    %919 = vmatpush2.msra.mxu0 0.0
    %920 = vmatprep.subr.mxu0 0.0
    %921 = vmatpush2.msra.mxu0 0.0
    %922 = vmatprep.subr.mxu0 0.0
    %923 = vmatpush2.msra.mxu0 0.0
    %924 = vmatprep.subr.mxu0 0.0
    %925 = vmatpush2.msra.mxu0 0.0
    %926 = vmatprep.mubr.f32.mxu0 0.0
    %927 = vmatmul.mubr.f32.gmra.mxu0 %v860
    %v928 = vpop.f32.mrf.mxu0
    %v929 = vadd.f32 0.0, %v928
    %v930 = vpop.f32.mrf.mxu0
    %931 = vdwg.mxu0
    %v932 = vadd.f32 %v146, %v929
    %v933 = vxor.u32 %v932, 2147483648
    %v934 = vmul.f32 %v933, 1.442695
    %v935 = vpow.pop %v934
    %v936 = vadd.f32 %v935, 1.0
    %v937 = vrcp.pop %v936
    %v938 = vmul.f32 1.0, %v937
    %v939 = vmul.f32 %v938, 2.0
    %v940 = vsub.f32 %v939, 1.0
    %v941 = vmul.f32 %v938, %v850
    %943 = vrot.lane.b32.xlu0 %v940, 64
    %v944 = vpop.permute.xlu0 %943
    %v946 = vmul.f32 %v938, %v944
    %948 = vrot.lane.b32.xlu0 %v946, 32
    %v949 = vpop.permute.xlu0 %948
    %v951 = vadd.f32 %v941, %v949
    %v952 = vtanh.pop %v951
    %954 = vrot.lane.b32.xlu0 %v952, 64
    %v955 = vpop.permute.xlu0 %954
    %v957 = vmul.f32 %v938, %v955
    %959 = vrot.lane.b32.xlu0 %v957, 32
    %v960 = vpop.permute.xlu0 %959
    %vm962 = vcmask 257024
    %963 = vst.msk [vmem:[#allocation2] sm:$0xf] %vm962, %v960
    // Predicated region
    $region18: #{tpu_custom_call.1} parent=1 // pred_check
      _
    $region19: #{tpu_custom_call.1} parent=1 // pred_check_branch
      %965 = sbr.rel (0) target = $region21
    $region20: #{tpu_custom_call.1} parent=1 // pred_region
      %s967 = ssub.s32 64, 64
      %968 = vsyncadd [#allocation3], %s967
      %s970 = sshll.u32 [#allocation2], 4
      %s971 = int_to_ptr.vmem [resolvable:$true] %s970
      %973 = dma.vmem_to_hbm [thread:$0]  %s971, 64, %s4, [#allocation3]
    $region21: #{tpu_custom_call.1} parent=1 // pred_fallthru
      _
    // Predicated region
    $region22: #{tpu_custom_call.1} parent=1 // pred_check
      _
    $region23: #{tpu_custom_call.1} parent=1 // pred_check_branch
      %975 = sbr.rel (0) target = $region25
    $region24: #{tpu_custom_call.1} parent=1 // pred_region
      %976 = dma.done [#allocation3], 64
    $region25: #{tpu_custom_call.1} parent=1 // pred_fallthru
      _
    %977 = vsyncpa [#allocation3], 1

</llo_original>
